<compile_context>
chip_gen: v7x
topology: tpu7x:2x2x1
jax: 0.10.0
libtpu: 0.0.40
codegen_flags: <defaults>
</compile_context>

<pallas_src>
import jax
import jax.numpy as jnp
from jax.experimental import pallas as pl
from jax.experimental.pallas import tpu as pltpu


def _round_up(x: int, m: int) -> int:
    return (x + m - 1) // m * m


def _cdiv(a: int, b: int) -> int:
    return -(-a // b)


# Per-buffer VMEM budget for the x tile (double-buffered by BlockSpec), kept
# well inside v7x's 32 MiB scoped default (64 MiB physical).
_X_TILE_BYTES = 8 * 1024 * 1024


def _linear_kernel_single_k(x_ref, w_ref, b_ref, o_ref):
    # Whole-K matmul: accumulation stays inside the MXU result buffer, no VPU
    # read-modify-write and no f32 scratch.  Bias add + cast fused into the
    # single store of each output tile.
    o_ref[...] = (
        jnp.dot(x_ref[...], w_ref[...], preferred_element_type=jnp.float32)
        + b_ref[...]
    ).astype(o_ref.dtype)


def _linear_kernel_multi_k(x_ref, w_ref, b_ref, o_ref, acc_ref):
    # Grid = (M tiles, N tiles, K tiles); the reduction axis (K) is last.
    k = pl.program_id(2)
    part = jnp.dot(x_ref[...], w_ref[...], preferred_element_type=jnp.float32)

    @pl.when(k == 0)
    def _():
        acc_ref[...] = part  # write directly, no zero-init-then-add

    @pl.when(k > 0)
    def _():
        acc_ref[...] += part

    @pl.when(k == pl.num_programs(2) - 1)
    def _():
        o_ref[...] = (acc_ref[...] + b_ref[...]).astype(o_ref.dtype)


def multiclass_head_forward(
    x: jax.Array,
    weight: jax.Array,
    bias: jax.Array,
    *,
    block_m: int = 1024,
    block_n: int = 256,
    block_k: int = 512,
    max_single_k: int = 2048,
) -> jax.Array:
    """Pallas TPU implementation of MulticlassHead.forward.

    x:      (..., input_size)
    weight: (input_size, num_classes)   # = PyTorch fc.weight.T
    bias:   (num_classes,)              # = PyTorch fc.bias
    returns (..., num_classes) in x.dtype
    """
    orig_shape = x.shape
    if x.ndim != 2:
        x = x.reshape(-1, orig_shape[-1])
    M, K = x.shape
    K2, N = weight.shape
    assert K == K2, (K, K2)
    out_dtype = x.dtype

    itemsize = jnp.dtype(x.dtype).itemsize
    sub = {1: 32, 2: 16, 4: 8}.get(itemsize, 8)  # sublane multiple
    lane = 128

    # ---- N tiling: small/medium N -> one full-dim block (no padded output,
    #      no wrapper slice pass); large N -> lane-dense 256-wide tiles.
    if N <= max(block_n, lane):
        tn = N
    else:
        tn = _round_up(min(block_n, N), lane)
    grid_n = _cdiv(N, tn)

    # ---- K tiling: single full-K block whenever it fits comfortably; this is
    #      the common case for a classifier head and avoids padding x along K.
    if K <= max_single_k:
        tk = K
        grid_k = 1
    else:
        tk = _round_up(min(block_k, K), lane)
        if K % tk != 0:
            # Rare fallback (huge, non-128-multiple input_size): zero-pad K so
            # reduction tiles never fold garbage into the accumulator.
            Kp = _round_up(K, tk)
            x = jnp.pad(x, ((0, 0), (0, Kp - K)))
            weight = jnp.pad(weight, ((0, Kp - K), (0, 0)))
            K = Kp
        grid_k = K // tk

    # ---- M tiling: big tiles amortize grid-step overhead; ragged edges are
    #      handled by Pallas (OOB reads unused, OOB writes dropped), so x is
    #      never padded along M either.
    tm = M if M <= block_m else _round_up(block_m, sub)
    if M >= 2 * sub:
        # v7x: guarantee >= 2 M blocks so the "parallel" M axis can shard
        # across both TensorCores (harmless on single-TC v5e/v6e).
        tm = min(tm, _round_up(_cdiv(M, 2), sub))
    # Cap the x tile so double-buffering stays inside the VMEM scoped limit.
    max_rows = max(sub, (_X_TILE_BYTES // max(tk * itemsize, 1)) // sub * sub)
    tm = min(tm, max_rows)
    grid_m = _cdiv(M, tm)

    b2 = bias.reshape(1, N).astype(jnp.float32)

    cost = pl.CostEstimate(
        flops=2 * M * K * N,
        transcendentals=0,
        bytes_accessed=(
            x.size * itemsize
            + weight.size * weight.dtype.itemsize
            + b2.size * 4
            + M * N * jnp.dtype(out_dtype).itemsize
        ),
    )

    if grid_k == 1:
        out = pl.pallas_call(
            _linear_kernel_single_k,
            out_shape=jax.ShapeDtypeStruct((M, N), out_dtype),
            grid_spec=pltpu.PrefetchScalarGridSpec(
                num_scalar_prefetch=0,
                grid=(grid_m, grid_n),
                in_specs=[
                    pl.BlockSpec((tm, tk), lambda i, j: (i, 0)),  # x tile
                    pl.BlockSpec((tk, tn), lambda i, j: (0, j)),  # weight tile
                    pl.BlockSpec((1, tn), lambda i, j: (0, j)),   # bias row
                ],
                out_specs=pl.BlockSpec((tm, tn), lambda i, j: (i, j)),
            ),
            compiler_params=pltpu.CompilerParams(
                dimension_semantics=("parallel", "parallel"),
            ),
            cost_estimate=cost,
        )(x, weight, b2)
    else:
        out = pl.pallas_call(
            _linear_kernel_multi_k,
            out_shape=jax.ShapeDtypeStruct((M, N), out_dtype),
            grid_spec=pltpu.PrefetchScalarGridSpec(
                num_scalar_prefetch=0,
                grid=(grid_m, grid_n, grid_k),
                in_specs=[
                    pl.BlockSpec((tm, tk), lambda i, j, k: (i, k)),  # x tile
                    pl.BlockSpec((tk, tn), lambda i, j, k: (k, j)),  # weight
                    pl.BlockSpec((1, tn), lambda i, j, k: (0, j)),   # bias row
                ],
                out_specs=pl.BlockSpec((tm, tn), lambda i, j, k: (i, j)),
                scratch_shapes=[pltpu.VMEM((tm, tn), jnp.float32)],
            ),
            compiler_params=pltpu.CompilerParams(
                dimension_semantics=("parallel", "parallel", "arbitrary"),
            ),
            cost_estimate=cost,
        )(x, weight, b2)

    if len(orig_shape) != 2:
        out = out.reshape(*orig_shape[:-1], N)
    return out


def _reference(x, w, b):
    return x.astype(jnp.float32) @ w.astype(jnp.float32) + b[None, :]


if __name__ == "__main__":
    key = jax.random.PRNGKey(0)

    # --- Test 1: module-spec shapes (tiny head), f32, single-block fast path ---
    batch, input_size, num_classes = 8, 32, 8
    k1, k2, k3, key = jax.random.split(key, 4)
    x1 = jax.random.normal(k1, (batch, input_size), dtype=jnp.float32)
    w1 = jax.random.normal(k2, (input_size, num_classes), dtype=jnp.float32) * 0.05
    b1 = jax.random.normal(k3, (num_classes,), dtype=jnp.float32) * 0.05
    out1 = jax.block_until_ready(multiclass_head_forward(x1, w1, b1))
    ref1 = _reference(x1, w1, b1)
    assert out1.shape == (batch, num_classes), out1.shape
    assert jnp.allclose(out1, ref1, atol=1e-2, rtol=1e-2), "test1 mismatch"

    # --- Test 2: ragged M, multiple M blocks (v7x 2-TC sharding), tiny N ---
    batch, input_size, num_classes = 200, 384, 10
    k1, k2, k3, key = jax.random.split(key, 4)
    x2 = jax.random.normal(k1, (batch, input_size), dtype=jnp.float32)
    w2 = jax.random.normal(k2, (input_size, num_classes), dtype=jnp.float32) * 0.05
    b2 = jax.random.normal(k3, (num_classes,), dtype=jnp.float32) * 0.05
    out2 = jax.block_until_ready(multiclass_head_forward(x2, w2, b2, block_m=64))
    ref2 = _reference(x2, w2, b2)
    assert out2.shape == (batch, num_classes), out2.shape
    assert jnp.allclose(out2, ref2, atol=2e-2, rtol=2e-2), "test2 mismatch"

    # --- Test 3: multi-K reduction path (forced with a small max_single_k) ---
    batch, input_size, num_classes = 16, 512, 8
    k1, k2, k3, key = jax.random.split(key, 4)
    x3 = jax.random.normal(k1, (batch, input_size), dtype=jnp.float32)
    w3 = jax.random.normal(k2, (input_size, num_classes), dtype=jnp.float32) * 0.05
    b3 = jax.random.normal(k3, (num_classes,), dtype=jnp.float32) * 0.05
    out3 = jax.block_until_ready(
        multiclass_head_forward(x3, w3, b3, block_k=128, max_single_k=256)
    )
    ref3 = _reference(x3, w3, b3)
    assert out3.shape == (batch, num_classes), out3.shape
    assert jnp.allclose(out3, ref3, atol=2e-2, rtol=2e-2), "test3 mismatch"

    # --- Test 4: caller-supplied bf16 activations/weights (f32 accumulate) ---
    xb = x2.astype(jnp.bfloat16)
    wb = w2.astype(jnp.bfloat16)
    out4 = jax.block_until_ready(multiclass_head_forward(xb, wb, b2))
    assert out4.shape == (200, 10), out4.shape
    assert jnp.allclose(out4.astype(jnp.float32), ref2, atol=5e-2, rtol=5e-2), (
        "test4 mismatch"
    )

    print("KERNEL_OK")
</pallas_src>

<mosaic_0001>
module attributes {stable_mosaic.version = 11 : i64} {
  func.func @_linear_kernel_single_k(%arg0: i32, %arg1: i32, %arg2: memref<8x32xf32, #tpu.memory_space<vmem>>, %arg3: memref<32x8xf32, #tpu.memory_space<vmem>>, %arg4: memref<1x8xf32, #tpu.memory_space<vmem>>, %arg5: memref<8x8xf32, #tpu.memory_space<vmem>>) attributes {dimension_semantics = [#tpu.dimension_semantics<parallel>, #tpu.dimension_semantics<parallel>], iteration_bounds = array<i64: 1, 1>, scalar_prefetch = 0 : i64, scratch_operands = 0 : i64, tpu.core_type = #tpu.core_type<tc>, window_params = [{transform_indices = @transform_0, window_bounds = array<i64: 8, 32>}, {transform_indices = @transform_1, window_bounds = array<i64: 32, 8>}, {transform_indices = @transform_2, window_bounds = array<i64: 1, 8>}, {transform_indices = @transform_3, window_bounds = array<i64: 8, 8>}]} {
    %c0 = arith.constant 0 : index
    %c0_0 = arith.constant 0 : index
    %0 = vector.load %arg2[%c0, %c0_0] : memref<8x32xf32, #tpu.memory_space<vmem>>, vector<8x32xf32>
    %c0_1 = arith.constant 0 : index
    %c0_2 = arith.constant 0 : index
    %1 = vector.load %arg3[%c0_1, %c0_2] : memref<32x8xf32, #tpu.memory_space<vmem>>, vector<32x8xf32>
    %cst = arith.constant dense<0.000000e+00> : vector<8x8xf32>
    %2 = tpu.matmul %0, %1, %cst {dimension_numbers = #tpu.dot_dimension_numbers<[1], [0], [0], [1], [0, 0, 1, 1], [], []>} : vector<8x32xf32>, vector<32x8xf32>, vector<8x8xf32> -> vector<8x8xf32>
    %c0_3 = arith.constant 0 : index
    %c0_4 = arith.constant 0 : index
    %3 = vector.load %arg4[%c0_3, %c0_4] : memref<1x8xf32, #tpu.memory_space<vmem>>, vector<1x8xf32>
    %4 = vector.broadcast %3 : vector<1x8xf32> to vector<8x8xf32>
    %5 = arith.addf %2, %4 : vector<8x8xf32>
    %c0_5 = arith.constant 0 : index
    %c0_6 = arith.constant 0 : index
    %6 = vector.load %arg5[%c0_5, %c0_6] : memref<8x8xf32, #tpu.memory_space<vmem>>, vector<8x8xf32>
    tpu.vector_store %arg5[%c0_5, %c0_6], %5 {strides = array<i32>} : memref<8x8xf32, #tpu.memory_space<vmem>>, vector<8x8xf32>,
    return
  }
  func.func @transform_0(%arg0: i32, %arg1: i32) -> (i32, i32) {
    %c0_i32 = arith.constant 0 : i32
    %c0_i32_0 = arith.constant 0 : i32
    return %arg0, %c0_i32 : i32, i32
  }
  func.func @transform_1(%arg0: i32, %arg1: i32) -> (i32, i32) {
    %c0_i32 = arith.constant 0 : i32
    %c0_i32_0 = arith.constant 0 : i32
    return %c0_i32, %arg1 : i32, i32
  }
  func.func @transform_2(%arg0: i32, %arg1: i32) -> (i32, i32) {
    %c0_i32 = arith.constant 0 : i32
    %c0_i32_0 = arith.constant 0 : i32
    return %c0_i32, %arg1 : i32, i32
  }
  func.func @transform_3(%arg0: i32, %arg1: i32) -> (i32, i32) {
    %c0_i32 = arith.constant 0 : i32
    return %arg0, %arg1 : i32, i32
  }
}

</mosaic_0001>

<llo_original>
// kernel: tpu_custom_call.1
$region0: #{tpu_custom_call.1}
  #allocation0 [shape = 'u32[]', space=smem, size = 0x4, offset = 0x4, fixed_abs, tag = 'smem constant byte address 0x4 - core index']
  #allocation1 [shape = 'u32[144,128]{1,0:T(1,128)}', space=vmem, size = 0x12000, scoped, tag = 'internal scratch']
  %s0 = inlined_call_operand.vmem [shape: f32[8,32], index: 0, kind: input, shape index: {}]
  %s1 = inlined_call_operand.vmem [shape: f32[32,8], index: 1, kind: input, shape index: {}]
  %s2 = inlined_call_operand.vmem [shape: f32[1,8], index: 2, kind: input, shape index: {}]
  %s3 = inlined_call_operand.hbm [shape: f32[8,8], index: 3, kind: output, shape index: {}]
  %s4 = sld [smem:[#allocation0]]
  $region22: #{tpu_custom_call.1} parent=0
    _
  %s6 = ssub.s32 1, %s4
  %s7 = scalar_select 0, %s6, %s4
  $region1: #{tpu_custom_call.1} parent=0
    #allocation2 [shape = 'u8[4096]{0}', space=vmem, size = 0x1000, scoped, tag = 'output window, operand 0, single buffered']
    #allocation3 [shape = 's32[1]{0}', space=sflag, size = 0x4, scoped, tag = 'scoped memory for tpu_custom_call.1']
    %8 = vsyncpa [#allocation3], 0
    // Predicated region
    $region2: #{tpu_custom_call.1} parent=1 // pred_check
      _
    $region3: #{tpu_custom_call.1} parent=1 // pred_check_branch
      %10 = sbr.rel (0) target = $region5
    $region4: #{tpu_custom_call.1} parent=1 // pred_region
      _
    $region5: #{tpu_custom_call.1} parent=1 // pred_fallthru
      _
    // Predicated region
    $region6: #{tpu_custom_call.1} parent=1 // pred_check
      _
    $region7: #{tpu_custom_call.1} parent=1 // pred_check_branch
      %12 = sbr.rel (0) target = $region9
    $region8: #{tpu_custom_call.1} parent=1 // pred_region
      _
    $region9: #{tpu_custom_call.1} parent=1 // pred_fallthru
      _
    // Predicated region
    $region10: #{tpu_custom_call.1} parent=1 // pred_check
      _
    $region11: #{tpu_custom_call.1} parent=1 // pred_check_branch
      %14 = sbr.rel (0) target = $region13
    $region12: #{tpu_custom_call.1} parent=1 // pred_region
      _
    $region13: #{tpu_custom_call.1} parent=1 // pred_fallthru
      _
    %v15 = vld [vmem:[%s0] sm:$0xff]
    %v16 = vld [vmem:[%s1] sm:$0xff]
    %v17 = vld [vmem:[%s1 + $0x8] sm:$0xff]
    %v18 = vld [vmem:[%s1 + $0x10] sm:$0xff]
    %v19 = vld [vmem:[%s1 + $0x18] sm:$0xff]
    %v20 = vld [vmem:[%s2] sm:$0x1]
    %v22 = vlaneseq
    %v23 = vshrl.u32 %v22, 7
    %v24 = vsub.s32 0, %v23
    %v25 = vrot.slane %v20, %v24
    %vm27 = vcmask 261120
    %v29 = vsel %vm27, %v15, 0
    %31 = vmatprep.subr.mxu0 0.0
    %32 = vmatpush1.msra.mxu0 %v16
    %33 = vmatprep.subr.mxu0 0.0
    %34 = vmatpush1.msra.mxu0 %v17
    %35 = vmatprep.subr.mxu0 0.0
    %36 = vmatpush1.msra.mxu0 %v18
    %37 = vmatprep.subr.mxu0 0.0
    %38 = vmatpush1.msra.mxu0 %v19
    %39 = vmatprep.subr.mxu0 0.0
    %40 = vmatpush1.msra.mxu0 0.0
    %41 = vmatprep.subr.mxu0 0.0
    %42 = vmatpush1.msra.mxu0 0.0
    %43 = vmatprep.subr.mxu0 0.0
    %44 = vmatpush1.msra.mxu0 0.0
    %45 = vmatprep.subr.mxu0 0.0
    %46 = vmatpush1.msra.mxu0 0.0
    %47 = vmatprep.subr.mxu0 0.0
    %48 = vmatpush1.msra.mxu0 0.0
    %49 = vmatprep.subr.mxu0 0.0
    %50 = vmatpush1.msra.mxu0 0.0
    %51 = vmatprep.subr.mxu0 0.0
    %52 = vmatpush1.msra.mxu0 0.0
    %53 = vmatprep.subr.mxu0 0.0
    %54 = vmatpush1.msra.mxu0 0.0
    %55 = vmatprep.subr.mxu0 0.0
    %56 = vmatpush1.msra.mxu0 0.0
    %57 = vmatprep.subr.mxu0 0.0
    %58 = vmatpush1.msra.mxu0 0.0
    %59 = vmatprep.subr.mxu0 0.0
    %60 = vmatpush1.msra.mxu0 0.0
    %61 = vmatprep.subr.mxu0 0.0
    %62 = vmatpush1.msra.mxu0 0.0
    %63 = vmatprep.subr.mxu0 0.0
    %64 = vmatpush1.msra.mxu0 0.0
    %65 = vmatprep.subr.mxu0 0.0
    %66 = vmatpush1.msra.mxu0 0.0
    %67 = vmatprep.subr.mxu0 0.0
    %68 = vmatpush1.msra.mxu0 0.0
    %69 = vmatprep.subr.mxu0 0.0
    %70 = vmatpush1.msra.mxu0 0.0
    %71 = vmatprep.subr.mxu0 0.0
    %72 = vmatpush1.msra.mxu0 0.0
    %73 = vmatprep.subr.mxu0 0.0
    %74 = vmatpush1.msra.mxu0 0.0
    %75 = vmatprep.subr.mxu0 0.0
    %76 = vmatpush1.msra.mxu0 0.0
    %77 = vmatprep.subr.mxu0 0.0
    %78 = vmatpush1.msra.mxu0 0.0
    %79 = vmatprep.subr.mxu0 0.0
    %80 = vmatpush1.msra.mxu0 0.0
    %81 = vmatprep.subr.mxu0 0.0
    %82 = vmatpush1.msra.mxu0 0.0
    %83 = vmatprep.subr.mxu0 0.0
    %84 = vmatpush1.msra.mxu0 0.0
    %85 = vmatprep.subr.mxu0 0.0
    %86 = vmatpush1.msra.mxu0 0.0
    %87 = vmatprep.subr.mxu0 0.0
    %88 = vmatpush1.msra.mxu0 0.0
    %89 = vmatprep.subr.mxu0 0.0
    %90 = vmatpush1.msra.mxu0 0.0
    %91 = vmatprep.subr.mxu0 0.0
    %92 = vmatpush1.msra.mxu0 0.0
    %93 = vmatprep.subr.mxu0 0.0
    %94 = vmatpush1.msra.mxu0 0.0
    %95 = vmatprep.mubr.f32.mxu0 0.0
    %96 = vmatmul.mubr.f32.gmra.mrb[0].mxu0 %v29
    %v97 = vpop.f32.mrb[0].mxu0
    %v98 = vadd.f32 %v25, %v97
    %v99 = vpop.f32.mrb[0].mxu0
    %100 = vdwg.mxu0
    %vm101 = vcmask 64512
    %102 = vst.msk [vmem:[#allocation2] sm:$0xff] %vm101, %v98
    // Predicated region
    $region14: #{tpu_custom_call.1} parent=1 // pred_check
      _
    $region15: #{tpu_custom_call.1} parent=1 // pred_check_branch
      %104 = sbr.rel (0) target = $region17
    $region16: #{tpu_custom_call.1} parent=1 // pred_region
      %s106 = ssub.s32 128, 128
      %107 = vsyncadd [#allocation3], %s106
      %s109 = sshll.u32 [#allocation2], 4
      %s110 = int_to_ptr.vmem [resolvable:$true] %s109
      %112 = dma.vmem_to_hbm [thread:$0]  %s110, 128, %s3, [#allocation3]
    $region17: #{tpu_custom_call.1} parent=1 // pred_fallthru
      _
    // Predicated region
    $region18: #{tpu_custom_call.1} parent=1 // pred_check
      _
    $region19: #{tpu_custom_call.1} parent=1 // pred_check_branch
      %114 = sbr.rel (0) target = $region21
    $region20: #{tpu_custom_call.1} parent=1 // pred_region
      %115 = dma.done [#allocation3], 128
    $region21: #{tpu_custom_call.1} parent=1 // pred_fallthru
      _
    %116 = vsyncpa [#allocation3], 1

</llo_original>
